<compile_context>
chip_gen: v5e
topology: v5e:2x2
jax: 0.10.0
libtpu: 0.0.40
codegen_flags: <defaults>
</compile_context>

<pallas_src>
import jax
import jax.numpy as jnp
from jax.experimental import pallas as pl
from jax.experimental.pallas import tpu as pltpu


# ------------------------------------------------------------------
# Fixed model dimensions (from config) and packed-weight row layout.
# Every block is sublane-aligned (row offsets are multiples of 8) and lane-padded
# to the full 128-lane width (4H == 128), so in-kernel carving is a plain view.
# ------------------------------------------------------------------
D, H, NF, FD, OUT = 16, 32, 4, 8, 4
G = 4 * H                      # 128 gate lanes

R_WIH = 0                      # rows  0:16   W_ih^T              (D,  G)
R_WHH = R_WIH + D              # rows 16:48   W_hh^T              (H,  G)
R_B   = R_WHH + H              # row  48      b_ih + b_hh         (1,  G)
R_WF  = R_B + 8                # rows 56:64   W_flat^T  in [0:NF, 0:FD]
R_BF  = R_WF + 8               # row  64      b_flat    in [0:FD]
R_WOA = R_BF + 8               # rows 72:104  W_out[:, :H]^T  in [:, 0:OUT]
R_WOB = R_WOA + H              # rows 104:112 W_out[:, H:]^T  in [0:FD, 0:OUT]
R_BO  = R_WOB + 8              # row  112     b_out     in [0:OUT]
R_TOTAL = R_BO + 8             # 120 rows total -> (120, 128) f32 ~= 60 KB


# ------------------------------------------------------------------
# Fused kernel: input projection -> unrolled LSTM recurrence -> mean pool ->
#               flat_fc -> out_layer (split-weight concat) -> sigmoid
# ------------------------------------------------------------------
def net_kernel(seq_ref, flat_ref, w_ref, out_ref):
    # seq_ref:  (BB, T, D)   batch block of the input sequence (batch-major)
    # flat_ref: (BB, NF)     batch block of flat features
    # w_ref:    (120, 128)   packed, tile-aligned weights/biases (see layout above)
    # out_ref:  (BB, OUT)
    BB, T, Din = seq_ref.shape

    # ---- Carve packed weights with static, tile-aligned ref slices ----
    wih_t = w_ref[R_WIH:R_WIH + Din, :]          # (D, 4H)
    whh_t = w_ref[R_WHH:R_WHH + H, :]            # (H, 4H)
    b     = w_ref[R_B:R_B + 1, :]                # (1, 4H)
    wf    = w_ref[R_WF:R_WF + 8, :]              # (8, 128); real in [0:NF, 0:FD]
    bf    = w_ref[R_BF:R_BF + 1, :]              # (1, 128); real in [0:FD]
    woa   = w_ref[R_WOA:R_WOA + H, :]            # (H, 128); real in [:, 0:OUT]
    wob   = w_ref[R_WOB:R_WOB + 8, :]            # (8, 128); real in [0:FD, 0:OUT]
    bo    = w_ref[R_BO:R_BO + 1, :]              # (1, 128); real in [0:OUT]

    # ---- Hoisted input projection: ONE matmul + bias for all time steps ----
    x2d = seq_ref[...].reshape(BB * T, Din)                       # batch-major rows
    xw = (jnp.dot(x2d, wih_t, preferred_element_type=jnp.float32)
          + b)                                                    # (BB*T, 4H)
    # Re-order ONCE to time-major so each step reads a contiguous sublane slice.
    xw_tm = xw.reshape(BB, T, G).transpose(1, 0, 2).reshape(T * BB, G)

    h = jnp.zeros((BB, H), jnp.float32)
    c = jnp.zeros((BB, H), jnp.float32)
    acc = jnp.zeros((BB, H), jnp.float32)

    # ---- Fully unrolled recurrence (T is static & small); only h @ W_hh is serial ----
    for t in range(T):
        gates = xw_tm[t * BB:(t + 1) * BB, :] + jnp.dot(
            h, whh_t, preferred_element_type=jnp.float32)         # (BB, 4H)
        # one full-width sigmoid + one full-width tanh over all 128 gate lanes
        sig = jax.nn.sigmoid(gates)
        th = jnp.tanh(gates)
        i = sig[:, 0 * H:1 * H]
        f = sig[:, 1 * H:2 * H]
        g = th[:, 2 * H:3 * H]
        o = sig[:, 3 * H:4 * H]
        c = f * c + i * g
        h = o * jnp.tanh(c)
        acc = acc + h

    lstm_out = acc * (1.0 / T)                                    # mean pooling

    # ---- Head: flat_fc -> concat([lstm_out, flat_p]) @ W_out^T + b_out -> sigmoid ----
    # (concat + matmul expressed as split-weight matmul-sum; stays lane-friendly)
    flat_p_pad = (jnp.dot(flat_ref[...], wf[0:NF, :],
                          preferred_element_type=jnp.float32) + bf)   # (BB,128), 0:FD real
    y_pad = (jnp.dot(lstm_out, woa, preferred_element_type=jnp.float32)
             + jnp.dot(flat_p_pad[:, 0:FD], wob,
                       preferred_element_type=jnp.float32)
             + bo)                                                 # (BB,128), 0:OUT real
    # NOTE: OUT=4 < 128 -> masked store; negligible for a single (BB,4) write.
    out_ref[...] = jax.nn.sigmoid(y_pad[:, 0:OUT])


# ------------------------------------------------------------------
# Parameter packing (done ONCE, outside jit): transposes, bias fusion, weight split,
# all stacked into a single (8,128)-tile-aligned buffer -> one input DMA per call.
# ------------------------------------------------------------------
def prepare_params(raw):
    W = jnp.zeros((R_TOTAL, G), jnp.float32)
    W = W.at[R_WIH:R_WIH + D, :].set(jnp.transpose(raw["w_ih"]))          # (D, 4H)
    W = W.at[R_WHH:R_WHH + H, :].set(jnp.transpose(raw["w_hh"]))          # (H, 4H)
    W = W.at[R_B, :].set(raw["b_ih"] + raw["b_hh"])                       # (4H,)
    W = W.at[R_WF:R_WF + NF, 0:FD].set(jnp.transpose(raw["w_flat"]))      # (NF, FD)
    W = W.at[R_BF, 0:FD].set(raw["b_flat"])                               # (FD,)
    W = W.at[R_WOA:R_WOA + H, 0:OUT].set(jnp.transpose(raw["w_out"][:, :H]))
    W = W.at[R_WOB:R_WOB + FD, 0:OUT].set(jnp.transpose(raw["w_out"][:, H:]))
    W = W.at[R_BO, 0:OUT].set(raw["b_out"])
    return W


# ------------------------------------------------------------------
# Full Net.forward : exactly one pallas_call per forward, batch grid (parallel).
# ------------------------------------------------------------------
@jax.jit
def net_forward(seq_btd, flat, w_packed):
    B, T, Din = seq_btd.shape
    BB = B if B <= 128 else 128          # batch block (grid=(1,) at B=2)
    assert B % BB == 0
    grid = (B // BB,)

    cost = pl.CostEstimate(
        flops=int(2 * B * T * Din * G + 2 * B * T * H * G
                  + 2 * B * (NF * FD + H * OUT + FD * OUT)),
        transcendentals=int(B * T * (2 * G + H) + B * OUT),
        bytes_accessed=int(4 * (B * T * Din + B * NF + R_TOTAL * G + B * OUT)),
    )

    return pl.pallas_call(
        net_kernel,
        out_shape=jax.ShapeDtypeStruct((B, OUT), jnp.float32),
        grid=grid,
        in_specs=[
            pl.BlockSpec((BB, T, Din), lambda i: (i, 0, 0)),
            pl.BlockSpec((BB, NF), lambda i: (i, 0)),
            pl.BlockSpec((R_TOTAL, G), lambda i: (0, 0)),
        ],
        out_specs=pl.BlockSpec((BB, OUT), lambda i: (i, 0)),
        compiler_params=pltpu.CompilerParams(
            dimension_semantics=("parallel",)),
        cost_estimate=cost,
    )(seq_btd, flat, w_packed)


# ------------------------------------------------------------------
# Pure-JAX reference (from raw PyTorch-layout weights) for correctness checking
# ------------------------------------------------------------------
def net_forward_ref(seq_btd, flat, raw):
    x = jnp.transpose(seq_btd, (1, 0, 2))     # torch: seq.permute(1, 0, 2)
    T, B, Din = x.shape
    Hh = raw["w_hh"].shape[1]
    w_ih_t = raw["w_ih"].T
    w_hh_t = raw["w_hh"].T
    b = raw["b_ih"] + raw["b_hh"]
    h = jnp.zeros((B, Hh), jnp.float32)
    c = jnp.zeros((B, Hh), jnp.float32)
    hs = []
    for t in range(T):
        gates = x[t] @ w_ih_t + h @ w_hh_t + b
        i = jax.nn.sigmoid(gates[:, 0 * Hh:1 * Hh])
        f = jax.nn.sigmoid(gates[:, 1 * Hh:2 * Hh])
        g = jnp.tanh(gates[:, 2 * Hh:3 * Hh])
        o = jax.nn.sigmoid(gates[:, 3 * Hh:4 * Hh])
        c = f * c + i * g
        h = o * jnp.tanh(c)
        hs.append(h)
    lstm_out = jnp.mean(jnp.stack(hs, axis=0), axis=0)       # mean pooling
    flat_p = flat @ raw["w_flat"].T + raw["b_flat"]
    feat = jnp.concatenate([lstm_out, flat_p], axis=1)
    y = feat @ raw["w_out"].T + raw["b_out"]
    return jax.nn.sigmoid(y)


if __name__ == "__main__":
    # config-consistent small shapes
    B, T = 2, 8                 # batch, seq_len   (lstm_indim = D = 16)

    key = jax.random.PRNGKey(0)
    ks = jax.random.split(key, 10)
    scale = 0.1
    raw = {
        "w_ih":   scale * jax.random.normal(ks[0], (4 * H, D), jnp.float32),
        "w_hh":   scale * jax.random.normal(ks[1], (4 * H, H), jnp.float32),
        "b_ih":   scale * jax.random.normal(ks[2], (4 * H,), jnp.float32),
        "b_hh":   scale * jax.random.normal(ks[3], (4 * H,), jnp.float32),
        "w_flat": scale * jax.random.normal(ks[4], (FD, NF), jnp.float32),
        "b_flat": scale * jax.random.normal(ks[5], (FD,), jnp.float32),
        "w_out":  scale * jax.random.normal(ks[6], (OUT, H + FD), jnp.float32),
        "b_out":  scale * jax.random.normal(ks[7], (OUT,), jnp.float32),
    }
    seq = jax.random.normal(ks[8], (B, T, D), jnp.float32)
    flat = jax.random.normal(ks[9], (B, NF), jnp.float32)

    # one-time parameter packing (outside jit, outside the per-forward path)
    w_packed = jax.block_until_ready(prepare_params(raw))

    out = net_forward(seq, flat, w_packed)
    out = jax.block_until_ready(out)

    ref = net_forward_ref(seq, flat, raw)
    assert out.shape == (B, OUT), out.shape
    assert jnp.allclose(out, ref, atol=1e-5, rtol=1e-5), (out, ref)

    print("KERNEL_OK")
</pallas_src>

<mosaic_0001>
module attributes {stable_mosaic.version = 11 : i64} {
  func.func @net_kernel(%arg0: i32, %arg1: memref<2x8x16xf32, #tpu.memory_space<vmem>>, %arg2: memref<2x4xf32, #tpu.memory_space<vmem>>, %arg3: memref<120x128xf32, #tpu.memory_space<vmem>>, %arg4: memref<2x4xf32, #tpu.memory_space<vmem>>) attributes {dimension_semantics = [#tpu.dimension_semantics<parallel>], iteration_bounds = array<i64: 1>, scalar_prefetch = 0 : i64, scratch_operands = 0 : i64, tpu.core_type = #tpu.core_type<tc>, window_params = [{transform_indices = @transform_0, window_bounds = array<i64: 2, 8, 16>}, {transform_indices = @transform_1, window_bounds = array<i64: 2, 4>}, {pipeline_mode = #tpu.pipeline_mode<synchronous>, transform_indices = @transform_2, window_bounds = array<i64: 120, 128>}, {transform_indices = @transform_3, window_bounds = array<i64: 2, 4>}]} {
    %c0 = arith.constant 0 : index
    %c0_0 = arith.constant 0 : index
    %0 = vector.load %arg3[%c0, %c0_0] : memref<120x128xf32, #tpu.memory_space<vmem>>, vector<16x128xf32>
    %c16 = arith.constant 16 : index
    %c0_1 = arith.constant 0 : index
    %1 = vector.load %arg3[%c16, %c0_1] : memref<120x128xf32, #tpu.memory_space<vmem>>, vector<32x128xf32>
    %c48 = arith.constant 48 : index
    %c0_2 = arith.constant 0 : index
    %2 = vector.load %arg3[%c48, %c0_2] : memref<120x128xf32, #tpu.memory_space<vmem>>, vector<1x128xf32>
    %c56 = arith.constant 56 : index
    %c0_3 = arith.constant 0 : index
    %3 = vector.load %arg3[%c56, %c0_3] : memref<120x128xf32, #tpu.memory_space<vmem>>, vector<8x128xf32>
    %c64 = arith.constant 64 : index
    %c0_4 = arith.constant 0 : index
    %4 = vector.load %arg3[%c64, %c0_4] : memref<120x128xf32, #tpu.memory_space<vmem>>, vector<1x128xf32>
    %c72 = arith.constant 72 : index
    %c0_5 = arith.constant 0 : index
    %5 = vector.load %arg3[%c72, %c0_5] : memref<120x128xf32, #tpu.memory_space<vmem>>, vector<32x128xf32>
    %c104 = arith.constant 104 : index
    %c0_6 = arith.constant 0 : index
    %6 = vector.load %arg3[%c104, %c0_6] : memref<120x128xf32, #tpu.memory_space<vmem>>, vector<8x128xf32>
    %c112 = arith.constant 112 : index
    %c0_7 = arith.constant 0 : index
    %7 = vector.load %arg3[%c112, %c0_7] : memref<120x128xf32, #tpu.memory_space<vmem>>, vector<1x128xf32>
    %c0_8 = arith.constant 0 : index
    %c0_9 = arith.constant 0 : index
    %c0_10 = arith.constant 0 : index
    %8 = vector.load %arg1[%c0_8, %c0_9, %c0_10] : memref<2x8x16xf32, #tpu.memory_space<vmem>>, vector<2x8x16xf32>
    %9 = vector.shape_cast %8 : vector<2x8x16xf32> to vector<16x16xf32>
    %cst = arith.constant dense<0.000000e+00> : vector<16x128xf32>
    %10 = tpu.matmul %9, %0, %cst {dimension_numbers = #tpu.dot_dimension_numbers<[1], [0], [0], [1], [0, 0, 1, 1], [], []>} : vector<16x16xf32>, vector<16x128xf32>, vector<16x128xf32> -> vector<16x128xf32>
    %11 = vector.broadcast %2 : vector<1x128xf32> to vector<16x128xf32>
    %12 = arith.addf %10, %11 : vector<16x128xf32>
    %13 = vector.shape_cast %12 : vector<16x128xf32> to vector<2x8x128xf32>
    %14 = tpu.transpose %13, [1, 0, 2] : vector<2x8x128xf32> -> vector<8x2x128xf32>
    %15 = vector.shape_cast %14 : vector<8x2x128xf32> to vector<16x128xf32>
    %cst_11 = arith.constant 0.000000e+00 : f32
    %16 = vector.broadcast %cst_11 : f32 to vector<2x32xf32>
    %cst_12 = arith.constant 0.000000e+00 : f32
    %17 = vector.broadcast %cst_12 : f32 to vector<2x32xf32>
    %cst_13 = arith.constant 0.000000e+00 : f32
    %18 = vector.broadcast %cst_13 : f32 to vector<2x32xf32>
    %19 = vector.extract_strided_slice %15 {offsets = [0, 0], sizes = [2, 128], strides = [1, 1]} : vector<16x128xf32> to vector<2x128xf32>
    %cst_14 = arith.constant dense<0.000000e+00> : vector<2x128xf32>
    %20 = tpu.matmul %16, %1, %cst_14 {dimension_numbers = #tpu.dot_dimension_numbers<[1], [0], [0], [1], [0, 0, 1, 1], [], []>} : vector<2x32xf32>, vector<32x128xf32>, vector<2x128xf32> -> vector<2x128xf32>
    %21 = arith.addf %19, %20 : vector<2x128xf32>
    %22 = arith.negf %21 : vector<2x128xf32>
    %23 = math.exp %22 : vector<2x128xf32>
    %cst_15 = arith.constant 1.000000e+00 : f32
    %24 = vector.broadcast %cst_15 : f32 to vector<2x128xf32>
    %25 = arith.addf %24, %23 : vector<2x128xf32>
    %26 = arith.divf %24, %25 : vector<2x128xf32>
    %27 = math.tanh %21 : vector<2x128xf32>
    %28 = vector.extract_strided_slice %26 {offsets = [0, 0], sizes = [2, 32], strides = [1, 1]} : vector<2x128xf32> to vector<2x32xf32>
    %29 = vector.extract_strided_slice %26 {offsets = [0, 32], sizes = [2, 32], strides = [1, 1]} : vector<2x128xf32> to vector<2x32xf32>
    %30 = vector.extract_strided_slice %27 {offsets = [0, 64], sizes = [2, 32], strides = [1, 1]} : vector<2x128xf32> to vector<2x32xf32>
    %31 = vector.extract_strided_slice %26 {offsets = [0, 96], sizes = [2, 32], strides = [1, 1]} : vector<2x128xf32> to vector<2x32xf32>
    %32 = arith.mulf %29, %17 : vector<2x32xf32>
    %33 = arith.mulf %28, %30 : vector<2x32xf32>
    %34 = arith.addf %32, %33 : vector<2x32xf32>
    %35 = math.tanh %34 : vector<2x32xf32>
    %36 = arith.mulf %31, %35 : vector<2x32xf32>
    %37 = arith.addf %18, %36 : vector<2x32xf32>
    %38 = vector.extract_strided_slice %15 {offsets = [2, 0], sizes = [2, 128], strides = [1, 1]} : vector<16x128xf32> to vector<2x128xf32>
    %cst_16 = arith.constant dense<0.000000e+00> : vector<2x128xf32>
    %39 = tpu.matmul %36, %1, %cst_16 {dimension_numbers = #tpu.dot_dimension_numbers<[1], [0], [0], [1], [0, 0, 1, 1], [], []>} : vector<2x32xf32>, vector<32x128xf32>, vector<2x128xf32> -> vector<2x128xf32>
    %40 = arith.addf %38, %39 : vector<2x128xf32>
    %41 = arith.negf %40 : vector<2x128xf32>
    %42 = math.exp %41 : vector<2x128xf32>
    %cst_17 = arith.constant 1.000000e+00 : f32
    %43 = vector.broadcast %cst_17 : f32 to vector<2x128xf32>
    %44 = arith.addf %43, %42 : vector<2x128xf32>
    %45 = arith.divf %43, %44 : vector<2x128xf32>
    %46 = math.tanh %40 : vector<2x128xf32>
    %47 = vector.extract_strided_slice %45 {offsets = [0, 0], sizes = [2, 32], strides = [1, 1]} : vector<2x128xf32> to vector<2x32xf32>
    %48 = vector.extract_strided_slice %45 {offsets = [0, 32], sizes = [2, 32], strides = [1, 1]} : vector<2x128xf32> to vector<2x32xf32>
    %49 = vector.extract_strided_slice %46 {offsets = [0, 64], sizes = [2, 32], strides = [1, 1]} : vector<2x128xf32> to vector<2x32xf32>
    %50 = vector.extract_strided_slice %45 {offsets = [0, 96], sizes = [2, 32], strides = [1, 1]} : vector<2x128xf32> to vector<2x32xf32>
    %51 = arith.mulf %48, %34 : vector<2x32xf32>
    %52 = arith.mulf %47, %49 : vector<2x32xf32>
    %53 = arith.addf %51, %52 : vector<2x32xf32>
    %54 = math.tanh %53 : vector<2x32xf32>
    %55 = arith.mulf %50, %54 : vector<2x32xf32>
    %56 = arith.addf %37, %55 : vector<2x32xf32>
    %57 = vector.extract_strided_slice %15 {offsets = [4, 0], sizes = [2, 128], strides = [1, 1]} : vector<16x128xf32> to vector<2x128xf32>
    %cst_18 = arith.constant dense<0.000000e+00> : vector<2x128xf32>
    %58 = tpu.matmul %55, %1, %cst_18 {dimension_numbers = #tpu.dot_dimension_numbers<[1], [0], [0], [1], [0, 0, 1, 1], [], []>} : vector<2x32xf32>, vector<32x128xf32>, vector<2x128xf32> -> vector<2x128xf32>
    %59 = arith.addf %57, %58 : vector<2x128xf32>
    %60 = arith.negf %59 : vector<2x128xf32>
    %61 = math.exp %60 : vector<2x128xf32>
    %cst_19 = arith.constant 1.000000e+00 : f32
    %62 = vector.broadcast %cst_19 : f32 to vector<2x128xf32>
    %63 = arith.addf %62, %61 : vector<2x128xf32>
    %64 = arith.divf %62, %63 : vector<2x128xf32>
    %65 = math.tanh %59 : vector<2x128xf32>
    %66 = vector.extract_strided_slice %64 {offsets = [0, 0], sizes = [2, 32], strides = [1, 1]} : vector<2x128xf32> to vector<2x32xf32>
    %67 = vector.extract_strided_slice %64 {offsets = [0, 32], sizes = [2, 32], strides = [1, 1]} : vector<2x128xf32> to vector<2x32xf32>
    %68 = vector.extract_strided_slice %65 {offsets = [0, 64], sizes = [2, 32], strides = [1, 1]} : vector<2x128xf32> to vector<2x32xf32>
    %69 = vector.extract_strided_slice %64 {offsets = [0, 96], sizes = [2, 32], strides = [1, 1]} : vector<2x128xf32> to vector<2x32xf32>
    %70 = arith.mulf %67, %53 : vector<2x32xf32>
    %71 = arith.mulf %66, %68 : vector<2x32xf32>
    %72 = arith.addf %70, %71 : vector<2x32xf32>
    %73 = math.tanh %72 : vector<2x32xf32>
    %74 = arith.mulf %69, %73 : vector<2x32xf32>
    %75 = arith.addf %56, %74 : vector<2x32xf32>
    %76 = vector.extract_strided_slice %15 {offsets = [6, 0], sizes = [2, 128], strides = [1, 1]} : vector<16x128xf32> to vector<2x128xf32>
    %cst_20 = arith.constant dense<0.000000e+00> : vector<2x128xf32>
    %77 = tpu.matmul %74, %1, %cst_20 {dimension_numbers = #tpu.dot_dimension_numbers<[1], [0], [0], [1], [0, 0, 1, 1], [], []>} : vector<2x32xf32>, vector<32x128xf32>, vector<2x128xf32> -> vector<2x128xf32>
    %78 = arith.addf %76, %77 : vector<2x128xf32>
    %79 = arith.negf %78 : vector<2x128xf32>
    %80 = math.exp %79 : vector<2x128xf32>
    %cst_21 = arith.constant 1.000000e+00 : f32
    %81 = vector.broadcast %cst_21 : f32 to vector<2x128xf32>
    %82 = arith.addf %81, %80 : vector<2x128xf32>
    %83 = arith.divf %81, %82 : vector<2x128xf32>
    %84 = math.tanh %78 : vector<2x128xf32>
    %85 = vector.extract_strided_slice %83 {offsets = [0, 0], sizes = [2, 32], strides = [1, 1]} : vector<2x128xf32> to vector<2x32xf32>
    %86 = vector.extract_strided_slice %83 {offsets = [0, 32], sizes = [2, 32], strides = [1, 1]} : vector<2x128xf32> to vector<2x32xf32>
    %87 = vector.extract_strided_slice %84 {offsets = [0, 64], sizes = [2, 32], strides = [1, 1]} : vector<2x128xf32> to vector<2x32xf32>
    %88 = vector.extract_strided_slice %83 {offsets = [0, 96], sizes = [2, 32], strides = [1, 1]} : vector<2x128xf32> to vector<2x32xf32>
    %89 = arith.mulf %86, %72 : vector<2x32xf32>
    %90 = arith.mulf %85, %87 : vector<2x32xf32>
    %91 = arith.addf %89, %90 : vector<2x32xf32>
    %92 = math.tanh %91 : vector<2x32xf32>
    %93 = arith.mulf %88, %92 : vector<2x32xf32>
    %94 = arith.addf %75, %93 : vector<2x32xf32>
    %95 = vector.extract_strided_slice %15 {offsets = [8, 0], sizes = [2, 128], strides = [1, 1]} : vector<16x128xf32> to vector<2x128xf32>
    %cst_22 = arith.constant dense<0.000000e+00> : vector<2x128xf32>
    %96 = tpu.matmul %93, %1, %cst_22 {dimension_numbers = #tpu.dot_dimension_numbers<[1], [0], [0], [1], [0, 0, 1, 1], [], []>} : vector<2x32xf32>, vector<32x128xf32>, vector<2x128xf32> -> vector<2x128xf32>
    %97 = arith.addf %95, %96 : vector<2x128xf32>
    %98 = arith.negf %97 : vector<2x128xf32>
    %99 = math.exp %98 : vector<2x128xf32>
    %cst_23 = arith.constant 1.000000e+00 : f32
    %100 = vector.broadcast %cst_23 : f32 to vector<2x128xf32>
    %101 = arith.addf %100, %99 : vector<2x128xf32>
    %102 = arith.divf %100, %101 : vector<2x128xf32>
    %103 = math.tanh %97 : vector<2x128xf32>
    %104 = vector.extract_strided_slice %102 {offsets = [0, 0], sizes = [2, 32], strides = [1, 1]} : vector<2x128xf32> to vector<2x32xf32>
    %105 = vector.extract_strided_slice %102 {offsets = [0, 32], sizes = [2, 32], strides = [1, 1]} : vector<2x128xf32> to vector<2x32xf32>
    %106 = vector.extract_strided_slice %103 {offsets = [0, 64], sizes = [2, 32], strides = [1, 1]} : vector<2x128xf32> to vector<2x32xf32>
    %107 = vector.extract_strided_slice %102 {offsets = [0, 96], sizes = [2, 32], strides = [1, 1]} : vector<2x128xf32> to vector<2x32xf32>
    %108 = arith.mulf %105, %91 : vector<2x32xf32>
    %109 = arith.mulf %104, %106 : vector<2x32xf32>
    %110 = arith.addf %108, %109 : vector<2x32xf32>
    %111 = math.tanh %110 : vector<2x32xf32>
    %112 = arith.mulf %107, %111 : vector<2x32xf32>
    %113 = arith.addf %94, %112 : vector<2x32xf32>
    %114 = vector.extract_strided_slice %15 {offsets = [10, 0], sizes = [2, 128], strides = [1, 1]} : vector<16x128xf32> to vector<2x128xf32>
    %cst_24 = arith.constant dense<0.000000e+00> : vector<2x128xf32>
    %115 = tpu.matmul %112, %1, %cst_24 {dimension_numbers = #tpu.dot_dimension_numbers<[1], [0], [0], [1], [0, 0, 1, 1], [], []>} : vector<2x32xf32>, vector<32x128xf32>, vector<2x128xf32> -> vector<2x128xf32>
    %116 = arith.addf %114, %115 : vector<2x128xf32>
    %117 = arith.negf %116 : vector<2x128xf32>
    %118 = math.exp %117 : vector<2x128xf32>
    %cst_25 = arith.constant 1.000000e+00 : f32
    %119 = vector.broadcast %cst_25 : f32 to vector<2x128xf32>
    %120 = arith.addf %119, %118 : vector<2x128xf32>
    %121 = arith.divf %119, %120 : vector<2x128xf32>
    %122 = math.tanh %116 : vector<2x128xf32>
    %123 = vector.extract_strided_slice %121 {offsets = [0, 0], sizes = [2, 32], strides = [1, 1]} : vector<2x128xf32> to vector<2x32xf32>
    %124 = vector.extract_strided_slice %121 {offsets = [0, 32], sizes = [2, 32], strides = [1, 1]} : vector<2x128xf32> to vector<2x32xf32>
    %125 = vector.extract_strided_slice %122 {offsets = [0, 64], sizes = [2, 32], strides = [1, 1]} : vector<2x128xf32> to vector<2x32xf32>
    %126 = vector.extract_strided_slice %121 {offsets = [0, 96], sizes = [2, 32], strides = [1, 1]} : vector<2x128xf32> to vector<2x32xf32>
    %127 = arith.mulf %124, %110 : vector<2x32xf32>
    %128 = arith.mulf %123, %125 : vector<2x32xf32>
    %129 = arith.addf %127, %128 : vector<2x32xf32>
    %130 = math.tanh %129 : vector<2x32xf32>
    %131 = arith.mulf %126, %130 : vector<2x32xf32>
    %132 = arith.addf %113, %131 : vector<2x32xf32>
    %133 = vector.extract_strided_slice %15 {offsets = [12, 0], sizes = [2, 128], strides = [1, 1]} : vector<16x128xf32> to vector<2x128xf32>
    %cst_26 = arith.constant dense<0.000000e+00> : vector<2x128xf32>
    %134 = tpu.matmul %131, %1, %cst_26 {dimension_numbers = #tpu.dot_dimension_numbers<[1], [0], [0], [1], [0, 0, 1, 1], [], []>} : vector<2x32xf32>, vector<32x128xf32>, vector<2x128xf32> -> vector<2x128xf32>
    %135 = arith.addf %133, %134 : vector<2x128xf32>
    %136 = arith.negf %135 : vector<2x128xf32>
    %137 = math.exp %136 : vector<2x128xf32>
    %cst_27 = arith.constant 1.000000e+00 : f32
    %138 = vector.broadcast %cst_27 : f32 to vector<2x128xf32>
    %139 = arith.addf %138, %137 : vector<2x128xf32>
    %140 = arith.divf %138, %139 : vector<2x128xf32>
    %141 = math.tanh %135 : vector<2x128xf32>
    %142 = vector.extract_strided_slice %140 {offsets = [0, 0], sizes = [2, 32], strides = [1, 1]} : vector<2x128xf32> to vector<2x32xf32>
    %143 = vector.extract_strided_slice %140 {offsets = [0, 32], sizes = [2, 32], strides = [1, 1]} : vector<2x128xf32> to vector<2x32xf32>
    %144 = vector.extract_strided_slice %141 {offsets = [0, 64], sizes = [2, 32], strides = [1, 1]} : vector<2x128xf32> to vector<2x32xf32>
    %145 = vector.extract_strided_slice %140 {offsets = [0, 96], sizes = [2, 32], strides = [1, 1]} : vector<2x128xf32> to vector<2x32xf32>
    %146 = arith.mulf %143, %129 : vector<2x32xf32>
    %147 = arith.mulf %142, %144 : vector<2x32xf32>
    %148 = arith.addf %146, %147 : vector<2x32xf32>
    %149 = math.tanh %148 : vector<2x32xf32>
    %150 = arith.mulf %145, %149 : vector<2x32xf32>
    %151 = arith.addf %132, %150 : vector<2x32xf32>
    %152 = vector.extract_strided_slice %15 {offsets = [14, 0], sizes = [2, 128], strides = [1, 1]} : vector<16x128xf32> to vector<2x128xf32>
    %cst_28 = arith.constant dense<0.000000e+00> : vector<2x128xf32>
    %153 = tpu.matmul %150, %1, %cst_28 {dimension_numbers = #tpu.dot_dimension_numbers<[1], [0], [0], [1], [0, 0, 1, 1], [], []>} : vector<2x32xf32>, vector<32x128xf32>, vector<2x128xf32> -> vector<2x128xf32>
    %154 = arith.addf %152, %153 : vector<2x128xf32>
    %155 = arith.negf %154 : vector<2x128xf32>
    %156 = math.exp %155 : vector<2x128xf32>
    %cst_29 = arith.constant 1.000000e+00 : f32
    %157 = vector.broadcast %cst_29 : f32 to vector<2x128xf32>
    %158 = arith.addf %157, %156 : vector<2x128xf32>
    %159 = arith.divf %157, %158 : vector<2x128xf32>
    %160 = math.tanh %154 : vector<2x128xf32>
    %161 = vector.extract_strided_slice %159 {offsets = [0, 0], sizes = [2, 32], strides = [1, 1]} : vector<2x128xf32> to vector<2x32xf32>
    %162 = vector.extract_strided_slice %159 {offsets = [0, 32], sizes = [2, 32], strides = [1, 1]} : vector<2x128xf32> to vector<2x32xf32>
    %163 = vector.extract_strided_slice %160 {offsets = [0, 64], sizes = [2, 32], strides = [1, 1]} : vector<2x128xf32> to vector<2x32xf32>
    %164 = vector.extract_strided_slice %159 {offsets = [0, 96], sizes = [2, 32], strides = [1, 1]} : vector<2x128xf32> to vector<2x32xf32>
    %165 = arith.mulf %162, %148 : vector<2x32xf32>
    %166 = arith.mulf %161, %163 : vector<2x32xf32>
    %167 = arith.addf %165, %166 : vector<2x32xf32>
    %168 = math.tanh %167 : vector<2x32xf32>
    %169 = arith.mulf %164, %168 : vector<2x32xf32>
    %170 = arith.addf %151, %169 : vector<2x32xf32>
    %cst_30 = arith.constant 1.250000e-01 : f32
    %171 = vector.broadcast %cst_30 : f32 to vector<2x32xf32>
    %172 = arith.mulf %170, %171 : vector<2x32xf32>
    %c0_31 = arith.constant 0 : index
    %c0_32 = arith.constant 0 : index
    %173 = vector.load %arg2[%c0_31, %c0_32] : memref<2x4xf32, #tpu.memory_space<vmem>>, vector<2x4xf32>
    %174 = vector.extract_strided_slice %3 {offsets = [0, 0], sizes = [4, 128], strides = [1, 1]} : vector<8x128xf32> to vector<4x128xf32>
    %cst_33 = arith.constant dense<0.000000e+00> : vector<2x128xf32>
    %175 = tpu.matmul %173, %174, %cst_33 {dimension_numbers = #tpu.dot_dimension_numbers<[1], [0], [0], [1], [0, 0, 1, 1], [], []>} : vector<2x4xf32>, vector<4x128xf32>, vector<2x128xf32> -> vector<2x128xf32>
    %176 = vector.broadcast %4 : vector<1x128xf32> to vector<2x128xf32>
    %177 = arith.addf %175, %176 : vector<2x128xf32>
    %cst_34 = arith.constant dense<0.000000e+00> : vector<2x128xf32>
    %178 = tpu.matmul %172, %5, %cst_34 {dimension_numbers = #tpu.dot_dimension_numbers<[1], [0], [0], [1], [0, 0, 1, 1], [], []>} : vector<2x32xf32>, vector<32x128xf32>, vector<2x128xf32> -> vector<2x128xf32>
    %179 = vector.extract_strided_slice %177 {offsets = [0, 0], sizes = [2, 8], strides = [1, 1]} : vector<2x128xf32> to vector<2x8xf32>
    %cst_35 = arith.constant dense<0.000000e+00> : vector<2x128xf32>
    %180 = tpu.matmul %179, %6, %cst_35 {dimension_numbers = #tpu.dot_dimension_numbers<[1], [0], [0], [1], [0, 0, 1, 1], [], []>} : vector<2x8xf32>, vector<8x128xf32>, vector<2x128xf32> -> vector<2x128xf32>
    %181 = arith.addf %178, %180 : vector<2x128xf32>
    %182 = vector.broadcast %7 : vector<1x128xf32> to vector<2x128xf32>
    %183 = arith.addf %181, %182 : vector<2x128xf32>
    %184 = vector.extract_strided_slice %183 {offsets = [0, 0], sizes = [2, 4], strides = [1, 1]} : vector<2x128xf32> to vector<2x4xf32>
    %185 = arith.negf %184 : vector<2x4xf32>
    %186 = math.exp %185 : vector<2x4xf32>
    %cst_36 = arith.constant 1.000000e+00 : f32
    %187 = vector.broadcast %cst_36 : f32 to vector<2x4xf32>
    %188 = arith.addf %187, %186 : vector<2x4xf32>
    %189 = arith.divf %187, %188 : vector<2x4xf32>
    %c0_37 = arith.constant 0 : index
    %c0_38 = arith.constant 0 : index
    %190 = vector.load %arg4[%c0_37, %c0_38] : memref<2x4xf32, #tpu.memory_space<vmem>>, vector<2x4xf32>
    tpu.vector_store %arg4[%c0_37, %c0_38], %189 {strides = array<i32>} : memref<2x4xf32, #tpu.memory_space<vmem>>, vector<2x4xf32>,
    return
  }
  func.func @transform_0(%arg0: i32) -> (i32, i32, i32) {
    %c0_i32 = arith.constant 0 : i32
    %c0_i32_0 = arith.constant 0 : i32
    %c0_i32_1 = arith.constant 0 : i32
    return %arg0, %c0_i32, %c0_i32_0 : i32, i32, i32
  }
  func.func @transform_1(%arg0: i32) -> (i32, i32) {
    %c0_i32 = arith.constant 0 : i32
    %c0_i32_0 = arith.constant 0 : i32
    return %arg0, %c0_i32 : i32, i32
  }
  func.func @transform_2(%arg0: i32) -> (i32, i32) {
    %c0_i32 = arith.constant 0 : i32
    %c0_i32_0 = arith.constant 0 : i32
    %c0_i32_1 = arith.constant 0 : i32
    return %c0_i32, %c0_i32_0 : i32, i32
  }
  func.func @transform_3(%arg0: i32) -> (i32, i32) {
    %c0_i32 = arith.constant 0 : i32
    %c0_i32_0 = arith.constant 0 : i32
    return %arg0, %c0_i32 : i32, i32
  }
}

</mosaic_0001>

<llo_original>
// kernel: net_forward.1
$region0: #{net_forward.1}
  #allocation0 [shape = 'u32[]', space=smem, size = 0x4, offset = 0x4, fixed_abs, tag = 'smem constant byte address 0x4 - core index']
  #allocation1 [shape = 'u32[72,128]{1,0:T(1,128)}', space=vmem, size = 0x9000, scoped, tag = 'internal scratch']
  %s0 = inlined_call_operand.hbm [shape: f32[2,8,16], index: 0, kind: input, shape index: {}]
  %s1 = inlined_call_operand.hbm [shape: f32[2,4], index: 1, kind: input, shape index: {}]
  %s2 = inlined_call_operand.hbm [shape: f32[120,128], index: 2, kind: input, shape index: {}]
  %s3 = inlined_call_operand.hbm [shape: f32[2,4], index: 3, kind: output, shape index: {}]
  %s4 = sld [smem:[#allocation0]]
  $region34: #{net_forward.1} parent=0
    _
  %s6 = ssub.s32 1, %s4
  %s7 = scalar_select 0, %s6, %s4
  $region1: #{net_forward.1} parent=0
    #allocation2 [shape = 'u8[8192]{0}', space=vmem, size = 0x2000, scoped, tag = 'input window, operand 0, single buffered']
    #allocation3 [shape = 's32[1]{0}', space=sflag, size = 0x4, scoped, tag = 'scoped memory for net_forward.1']
    #allocation4 [shape = 's32[1]{0}', space=sflag, size = 0x4, scoped, tag = 'scoped memory for net_forward.1']
    #allocation5 [shape = 'u8[1024]{0}', space=vmem, size = 0x400, scoped, tag = 'input window, operand 1, single buffered']
    #allocation6 [shape = 's32[1]{0}', space=sflag, size = 0x4, scoped, tag = 'scoped memory for net_forward.1']
    #allocation7 [shape = 'u8[61440]{0}', space=vmem, size = 0xf000, scoped, tag = 'input window, operand 2, single buffered']
    #allocation8 [shape = 'u8[1024]{0}', space=vmem, size = 0x400, scoped, tag = 'output window, operand 0, single buffered']
    %8 = vsyncpa [#allocation3], 0
    %9 = vsyncpa [#allocation6], 0
    %10 = vsyncpa [#allocation4], 0
    // Predicated region
    $region2: #{net_forward.1} parent=1 // pred_check
      _
    $region3: #{net_forward.1} parent=1 // pred_check_branch
      %12 = sbr.rel (0) target = $region5
    $region4: #{net_forward.1} parent=1 // pred_region
      %14 = vsyncadd [#allocation3], 0
      %s15 = sshll.u32 %s0, 4
      %s16 = int_to_ptr.hbm [resolvable:$true] %s15
      %s17 = sshll.u32 [#allocation2], 4
      %s18 = int_to_ptr.vmem [resolvable:$true] %s17
      %23 = dma.hbm_to_vmem [thread:$0]  %s16, 256, %s18, [#allocation3], 128, 128, 8
    $region5: #{net_forward.1} parent=1 // pred_fallthru
      _
    // Predicated region
    $region6: #{net_forward.1} parent=1 // pred_check
      _
    $region7: #{net_forward.1} parent=1 // pred_check_branch
      %25 = sbr.rel (0) target = $region9
    $region8: #{net_forward.1} parent=1 // pred_region
      %27 = vsyncadd [#allocation6], 0
      %s29 = sshll.u32 %s1, 4
      %s30 = int_to_ptr.hbm [resolvable:$true] %s29
      %s31 = sshll.u32 [#allocation5], 4
      %s32 = int_to_ptr.vmem [resolvable:$true] %s31
      %34 = dma.hbm_to_vmem [thread:$0]  %s30, 32, %s32, [#allocation6]
    $region9: #{net_forward.1} parent=1 // pred_fallthru
      _
    // Predicated region
    $region10: #{net_forward.1} parent=1 // pred_check
      _
    $region11: #{net_forward.1} parent=1 // pred_check_branch
      %36 = sbr.rel (0) target = $region13
    $region12: #{net_forward.1} parent=1 // pred_region
      %38 = vsyncadd [#allocation6], 0
      %s39 = sshll.u32 %s2, 4
      %s40 = int_to_ptr.hbm [resolvable:$true] %s39
      %s41 = sshll.u32 [#allocation7], 4
      %s42 = int_to_ptr.vmem [resolvable:$true] %s41
      %47 = dma.hbm_to_vmem [thread:$0]  %s40, 1920, %s42, [#allocation6], 128, 128, 8
    $region13: #{net_forward.1} parent=1 // pred_fallthru
      _
    // Predicated region
    $region14: #{net_forward.1} parent=1 // pred_check
      _
    $region15: #{net_forward.1} parent=1 // pred_check_branch
      %49 = sbr.rel (0) target = $region17
    $region16: #{net_forward.1} parent=1 // pred_region
      %51 = dma.done [#allocation3], 256
    $region17: #{net_forward.1} parent=1 // pred_fallthru
      _
    // Predicated region
    $region18: #{net_forward.1} parent=1 // pred_check
      _
    $region19: #{net_forward.1} parent=1 // pred_check_branch
      %53 = sbr.rel (0) target = $region21
    $region20: #{net_forward.1} parent=1 // pred_region
      %55 = dma.done [#allocation6], 32
    $region21: #{net_forward.1} parent=1 // pred_fallthru
      _
    // Predicated region
    $region22: #{net_forward.1} parent=1 // pred_check
      _
    $region23: #{net_forward.1} parent=1 // pred_check_branch
      %57 = sbr.rel (0) target = $region25
    $region24: #{net_forward.1} parent=1 // pred_region
      %59 = dma.done [#allocation6], 1920
    $region25: #{net_forward.1} parent=1 // pred_fallthru
      _
    %v60 = vld [vmem:[#allocation7] sm:$0xff]
    %v61 = vld [vmem:[#allocation7 + $0x8] sm:$0xff]
    %v62 = vld [vmem:[#allocation7 + $0x10] sm:$0xff]
    %v63 = vld [vmem:[#allocation7 + $0x18] sm:$0xff]
    %v64 = vld [vmem:[#allocation7 + $0x20] sm:$0xff]
    %v65 = vld [vmem:[#allocation7 + $0x28] sm:$0xff]
    %v66 = vld [vmem:[#allocation7 + $0x30] sm:$0x1]
    %v67 = vld [vmem:[#allocation7 + $0x38] sm:$0xff]
    %v68 = vld [vmem:[#allocation7 + $0x40] sm:$0x1]
    %v69 = vld [vmem:[#allocation7 + $0x48] sm:$0xff]
    %v70 = vld [vmem:[#allocation7 + $0x50] sm:$0xff]
    %v71 = vld [vmem:[#allocation7 + $0x58] sm:$0xff]
    %v72 = vld [vmem:[#allocation7 + $0x60] sm:$0xff]
    %v73 = vld [vmem:[#allocation7 + $0x68] sm:$0xff]
    %v74 = vld [vmem:[#allocation7 + $0x70] sm:$0x1]
    %v75 = vld [vmem:[#allocation2] sm:$0xff]
    %v76 = vld [vmem:[#allocation2 + $0x8] sm:$0xff]
    %v77 = vperm.slane %v66, 0
    %vm78 = vcmask 130048
    %v80 = vsel %vm78, %v75, 0
    %v83 = vsel %vm78, %v76, 0
    %85 = vmatpush.msra.mxu0 0.0
    %86 = vmatpush.msra.mxu0 0.0
    %87 = vmatpush.msra.mxu0 0.0
    %88 = vmatpush.msra.mxu0 0.0
    %89 = vmatpush.msra.mxu0 0.0
    %90 = vmatpush.msra.mxu0 0.0
    %91 = vmatpush.msra.mxu0 0.0
    %92 = vmatpush.msra.mxu0 0.0
    %93 = vmatpush.msra.mxu0 0.0
    %94 = vmatpush.msra.mxu0 0.0
    %95 = vmatpush.msra.mxu0 0.0
    %96 = vmatpush.msra.mxu0 0.0
    %97 = vmatpush.msra.mxu0 0.0
    %98 = vmatpush.msra.mxu0 0.0
    %99 = vmatpush.msra.mxu0 %v61
    %100 = vmatpush.msra.mxu0 %v60
    %101 = vmatmul.f32.gmra.mxu0 %v80
    %v102 = vpop.f32.mrf.mxu0
    %v103 = vadd.f32 %v77, %v102
    %104 = vmatmul.f32.gmra.mxu0 %v83
    %v105 = vpop.f32.mrf.mxu0
    %v106 = vadd.f32 %v77, %v105
    %107 = vdwg.mxu0
    %v108 = vrot.slane %v103, 4
    %vm109 = vcmask 1047556
    %v110 = vsel %vm109, 0.0, %v108
    %v112 = vunpack.c.l.s4 1983009808
    %v113 = vunpack.c.0.s8 %v112
    %v114 = vperm.slane %v103, %v113
    %v116 = vunpack.c.l.s4 1983009808
    %v117 = vunpack.c.0.s8 %v116
    %v118 = vperm.slane %v110, %v117
    %v119 = vrot.slane %v106, 4
    %v120 = vsel %vm109, 0.0, %v119
    %v122 = vunpack.c.l.s4 1983009808
    %v123 = vunpack.c.0.s8 %v122
    %v124 = vperm.slane %v106, %v123
    %v126 = vunpack.c.l.s4 1983009808
    %v127 = vunpack.c.0.s8 %v126
    %v128 = vperm.slane %v120, %v127
    %v129 = vrot.slane %v124, 4
    %v130 = vsel %vm109, %v129, %v114
    %v131 = vrot.slane %v114, 4
    %v132 = vsel %vm109, %v124, %v131
    %v134 = vunpack.c.l.s4 1934713408
    %v135 = vunpack.c.0.s8 %v134
    %v136 = vperm.slane %v130, %v135
    %v138 = vunpack.c.l.s4 1934713408
    %v139 = vunpack.c.0.s8 %v138
    %v140 = vperm.slane %v132, %v139
    %v141 = vrot.slane %v128, 4
    %v142 = vsel %vm109, %v141, %v118
    %v143 = vrot.slane %v118, 4
    %v144 = vsel %vm109, %v128, %v143
    %v146 = vunpack.c.l.s4 1934713408
    %v147 = vunpack.c.0.s8 %v146
    %v148 = vperm.slane %v142, %v147
    %v150 = vunpack.c.l.s4 1934713408
    %v151 = vunpack.c.0.s8 %v150
    %v152 = vperm.slane %v144, %v151
    %v153 = vrot.slane %v136, 4
    %v154 = vsel %vm109, 0.0, %v153
    %v155 = vrot.slane %v140, 4
    %v156 = vsel %vm109, 0.0, %v155
    %v157 = vrot.slane %v148, 4
    %v158 = vsel %vm109, 0.0, %v157
    %v159 = vrot.slane %v152, 4
    %v160 = vsel %vm109, 0.0, %v159
    %vm161 = vcmask 261120
    %v163 = vsel %vm161, 0.0, 0
    %165 = vmatpush.msra.mxu0 0.0
    %166 = vmatpush.msra.mxu0 0.0
    %167 = vmatpush.msra.mxu0 0.0
    %168 = vmatpush.msra.mxu0 0.0
    %169 = vmatpush.msra.mxu0 0.0
    %170 = vmatpush.msra.mxu0 0.0
    %171 = vmatpush.msra.mxu0 0.0
    %172 = vmatpush.msra.mxu0 0.0
    %173 = vmatpush.msra.mxu0 0.0
    %174 = vmatpush.msra.mxu0 0.0
    %175 = vmatpush.msra.mxu0 0.0
    %176 = vmatpush.msra.mxu0 0.0
    %177 = vmatpush.msra.mxu0 %v65
    %178 = vmatpush.msra.mxu0 %v64
    %179 = vmatpush.msra.mxu0 %v63
    %180 = vmatpush.msra.mxu0 %v62
    %181 = vmatmul.f32.gmra.mxu0 %v163
    %v182 = vpop.f32.mrf.mxu0
    %v183 = vadd.f32 0.0, %v182
    %184 = vdwg.mxu0
    %v185 = vadd.f32 %v136, %v183
    %v186 = vxor.u32 %v185, 2147483648
    %v187 = vmul.f32 %v186, 1.442695
    %v188 = vpow.pop %v187
    %v189 = vadd.f32 %v188, 1.0
    %v190 = vrcp.pop %v189
    %v191 = vmul.f32 %v189, %v190
    %v192 = vsub.f32 1.0, %v191
    %v193 = vmul.f32 %v190, %v192
    %v194 = vadd.f32 %v190, %v193
    %vm195 = vweird.f32 %v189
    %vm196 = vweird.f32 %v190
    %vm197 = vmor %vm195, %vm196
    %v198 = vsel %vm197, %v190, %v194
    %v199 = vand.u32 2147483647, %v189
    %vm200 = vcmp.eq.f32.partialorder %v199, 8.507059e+37
    %v201 = vand.u32 %v189, 2147483648
    %v202 = vor.u32 1.1754944e-38, %v201
    %v203 = vsel %vm200, %v202, %v198
    %v204 = vmul.f32 1.0, %v203
    %v205 = vtanh.pop %v185
    %v206 = vmul.f32 %v204, 0.0
    %208 = vrot.lane.b32.xlu0 %v205, 64
    %v209 = vpop.permute.xlu0 %208
    %v211 = vmul.f32 %v204, %v209
    %213 = vrot.lane.b32.xlu0 %v211, 32
    %v214 = vpop.permute.xlu0 %213
    %v216 = vadd.f32 %v206, %v214
    %v217 = vtanh.pop %v216
    %219 = vrot.lane.b32.xlu0 %v217, 64
    %v220 = vpop.permute.xlu0 %219
    %v222 = vmul.f32 %v204, %v220
    %v223 = vadd.f32 %v222, 0.0
    %225 = vst [vmem:[#allocation1] ss:$4 sm:$0xff] %v222
    %v226 = vld.sshfl [vmem:[#allocation1] sm:$0xff pattern:$0x73625140]
    %227 = vrot.lane.b32.xlu0 %v226, 32
    %v228 = vpop.permute.xlu0 %227
    %v229 = vsel %vm161, %v228, 0
    %231 = vmatpush.msra.mxu0 0.0
    %232 = vmatpush.msra.mxu0 0.0
    %233 = vmatpush.msra.mxu0 0.0
    %234 = vmatpush.msra.mxu0 0.0
    %235 = vmatpush.msra.mxu0 0.0
    %236 = vmatpush.msra.mxu0 0.0
    %237 = vmatpush.msra.mxu0 0.0
    %238 = vmatpush.msra.mxu0 0.0
    %239 = vmatpush.msra.mxu0 0.0
    %240 = vmatpush.msra.mxu0 0.0
    %241 = vmatpush.msra.mxu0 0.0
    %242 = vmatpush.msra.mxu0 0.0
    %243 = vmatpush.msra.mxu0 %v65
    %244 = vmatpush.msra.mxu0 %v64
    %245 = vmatpush.msra.mxu0 %v63
    %246 = vmatpush.msra.mxu0 %v62
    %247 = vmatmul.f32.gmra.mxu0 %v229
    %v248 = vpop.f32.mrf.mxu0
    %v249 = vadd.f32 0.0, %v248
    %250 = vdwg.mxu0
    %v251 = vadd.f32 %v154, %v249
    %v252 = vxor.u32 %v251, 2147483648
    %v253 = vmul.f32 %v252, 1.442695
    %v254 = vpow.pop %v253
    %v255 = vadd.f32 %v254, 1.0
    %v256 = vrcp.pop %v255
    %v257 = vmul.f32 %v255, %v256
    %v258 = vsub.f32 1.0, %v257
    %v259 = vmul.f32 %v256, %v258
    %v260 = vadd.f32 %v256, %v259
    %vm261 = vweird.f32 %v255
    %vm262 = vweird.f32 %v256
    %vm263 = vmor %vm261, %vm262
    %v264 = vsel %vm263, %v256, %v260
    %v265 = vand.u32 2147483647, %v255
    %vm266 = vcmp.eq.f32.partialorder %v265, 8.507059e+37
    %v267 = vand.u32 %v255, 2147483648
    %v268 = vor.u32 1.1754944e-38, %v267
    %v269 = vsel %vm266, %v268, %v264
    %v270 = vmul.f32 1.0, %v269
    %v271 = vtanh.pop %v251
    %v272 = vmul.f32 %v270, %v216
    %274 = vrot.lane.b32.xlu0 %v271, 64
    %v275 = vpop.permute.xlu0 %274
    %v277 = vmul.f32 %v270, %v275
    %279 = vrot.lane.b32.xlu0 %v277, 32
    %v280 = vpop.permute.xlu0 %279
    %v282 = vadd.f32 %v272, %v280
    %v283 = vtanh.pop %v282
    %285 = vrot.lane.b32.xlu0 %v283, 64
    %v286 = vpop.permute.xlu0 %285
    %v288 = vmul.f32 %v270, %v286
    %v289 = vadd.f32 %v223, %v288
    %291 = vst [vmem:[#allocation1] ss:$4 sm:$0xff] %v288
    %v292 = vld.sshfl [vmem:[#allocation1] sm:$0xff pattern:$0x73625140]
    %293 = vrot.lane.b32.xlu0 %v292, 32
    %v294 = vpop.permute.xlu0 %293
    %v295 = vsel %vm161, %v294, 0
    %297 = vmatpush.msra.mxu0 0.0
    %298 = vmatpush.msra.mxu0 0.0
    %299 = vmatpush.msra.mxu0 0.0
    %300 = vmatpush.msra.mxu0 0.0
    %301 = vmatpush.msra.mxu0 0.0
    %302 = vmatpush.msra.mxu0 0.0
    %303 = vmatpush.msra.mxu0 0.0
    %304 = vmatpush.msra.mxu0 0.0
    %305 = vmatpush.msra.mxu0 0.0
    %306 = vmatpush.msra.mxu0 0.0
    %307 = vmatpush.msra.mxu0 0.0
    %308 = vmatpush.msra.mxu0 0.0
    %309 = vmatpush.msra.mxu0 %v65
    %310 = vmatpush.msra.mxu0 %v64
    %311 = vmatpush.msra.mxu0 %v63
    %312 = vmatpush.msra.mxu0 %v62
    %313 = vmatmul.f32.gmra.mxu0 %v295
    %v314 = vpop.f32.mrf.mxu0
    %v315 = vadd.f32 0.0, %v314
    %316 = vdwg.mxu0
    %v317 = vadd.f32 %v140, %v315
    %v318 = vxor.u32 %v317, 2147483648
    %v319 = vmul.f32 %v318, 1.442695
    %v320 = vpow.pop %v319
    %v321 = vadd.f32 %v320, 1.0
    %v322 = vrcp.pop %v321
    %v323 = vmul.f32 %v321, %v322
    %v324 = vsub.f32 1.0, %v323
    %v325 = vmul.f32 %v322, %v324
    %v326 = vadd.f32 %v322, %v325
    %vm327 = vweird.f32 %v321
    %vm328 = vweird.f32 %v322
    %vm329 = vmor %vm327, %vm328
    %v330 = vsel %vm329, %v322, %v326
    %v331 = vand.u32 2147483647, %v321
    %vm332 = vcmp.eq.f32.partialorder %v331, 8.507059e+37
    %v333 = vand.u32 %v321, 2147483648
    %v334 = vor.u32 1.1754944e-38, %v333
    %v335 = vsel %vm332, %v334, %v330
    %v336 = vmul.f32 1.0, %v335
    %v337 = vtanh.pop %v317
    %v338 = vmul.f32 %v336, %v282
    %340 = vrot.lane.b32.xlu0 %v337, 64
    %v341 = vpop.permute.xlu0 %340
    %v343 = vmul.f32 %v336, %v341
    %345 = vrot.lane.b32.xlu0 %v343, 32
    %v346 = vpop.permute.xlu0 %345
    %v348 = vadd.f32 %v338, %v346
    %v349 = vtanh.pop %v348
    %351 = vrot.lane.b32.xlu0 %v349, 64
    %v352 = vpop.permute.xlu0 %351
    %v354 = vmul.f32 %v336, %v352
    %v355 = vadd.f32 %v289, %v354
    %357 = vst [vmem:[#allocation1] ss:$4 sm:$0xff] %v354
    %v358 = vld.sshfl [vmem:[#allocation1] sm:$0xff pattern:$0x73625140]
    %359 = vrot.lane.b32.xlu0 %v358, 32
    %v360 = vpop.permute.xlu0 %359
    %v361 = vsel %vm161, %v360, 0
    %363 = vmatpush.msra.mxu0 0.0
    %364 = vmatpush.msra.mxu0 0.0
    %365 = vmatpush.msra.mxu0 0.0
    %366 = vmatpush.msra.mxu0 0.0
    %367 = vmatpush.msra.mxu0 0.0
    %368 = vmatpush.msra.mxu0 0.0
    %369 = vmatpush.msra.mxu0 0.0
    %370 = vmatpush.msra.mxu0 0.0
    %371 = vmatpush.msra.mxu0 0.0
    %372 = vmatpush.msra.mxu0 0.0
    %373 = vmatpush.msra.mxu0 0.0
    %374 = vmatpush.msra.mxu0 0.0
    %375 = vmatpush.msra.mxu0 %v65
    %376 = vmatpush.msra.mxu0 %v64
    %377 = vmatpush.msra.mxu0 %v63
    %378 = vmatpush.msra.mxu0 %v62
    %379 = vmatmul.f32.gmra.mxu0 %v361
    %v380 = vpop.f32.mrf.mxu0
    %v381 = vadd.f32 0.0, %v380
    %382 = vdwg.mxu0
    %v383 = vadd.f32 %v156, %v381
    %v384 = vxor.u32 %v383, 2147483648
    %v385 = vmul.f32 %v384, 1.442695
    %v386 = vpow.pop %v385
    %v387 = vadd.f32 %v386, 1.0
    %v388 = vrcp.pop %v387
    %v389 = vmul.f32 %v387, %v388
    %v390 = vsub.f32 1.0, %v389
    %v391 = vmul.f32 %v388, %v390
    %v392 = vadd.f32 %v388, %v391
    %vm393 = vweird.f32 %v387
    %vm394 = vweird.f32 %v388
    %vm395 = vmor %vm393, %vm394
    %v396 = vsel %vm395, %v388, %v392
    %v397 = vand.u32 2147483647, %v387
    %vm398 = vcmp.eq.f32.partialorder %v397, 8.507059e+37
    %v399 = vand.u32 %v387, 2147483648
    %v400 = vor.u32 1.1754944e-38, %v399
    %v401 = vsel %vm398, %v400, %v396
    %v402 = vmul.f32 1.0, %v401
    %v403 = vtanh.pop %v383
    %v404 = vmul.f32 %v402, %v348
    %406 = vrot.lane.b32.xlu0 %v403, 64
    %v407 = vpop.permute.xlu0 %406
    %v409 = vmul.f32 %v402, %v407
    %411 = vrot.lane.b32.xlu0 %v409, 32
    %v412 = vpop.permute.xlu0 %411
    %v414 = vadd.f32 %v404, %v412
    %v415 = vtanh.pop %v414
    %417 = vrot.lane.b32.xlu0 %v415, 64
    %v418 = vpop.permute.xlu0 %417
    %v420 = vmul.f32 %v402, %v418
    %v421 = vadd.f32 %v355, %v420
    %423 = vst [vmem:[#allocation1] ss:$4 sm:$0xff] %v420
    %v424 = vld.sshfl [vmem:[#allocation1] sm:$0xff pattern:$0x73625140]
    %425 = vrot.lane.b32.xlu0 %v424, 32
    %v426 = vpop.permute.xlu0 %425
    %v427 = vsel %vm161, %v426, 0
    %429 = vmatpush.msra.mxu0 0.0
    %430 = vmatpush.msra.mxu0 0.0
    %431 = vmatpush.msra.mxu0 0.0
    %432 = vmatpush.msra.mxu0 0.0
    %433 = vmatpush.msra.mxu0 0.0
    %434 = vmatpush.msra.mxu0 0.0
    %435 = vmatpush.msra.mxu0 0.0
    %436 = vmatpush.msra.mxu0 0.0
    %437 = vmatpush.msra.mxu0 0.0
    %438 = vmatpush.msra.mxu0 0.0
    %439 = vmatpush.msra.mxu0 0.0
    %440 = vmatpush.msra.mxu0 0.0
    %441 = vmatpush.msra.mxu0 %v65
    %442 = vmatpush.msra.mxu0 %v64
    %443 = vmatpush.msra.mxu0 %v63
    %444 = vmatpush.msra.mxu0 %v62
    %445 = vmatmul.f32.gmra.mxu0 %v427
    %v446 = vpop.f32.mrf.mxu0
    %v447 = vadd.f32 0.0, %v446
    %448 = vdwg.mxu0
    %v449 = vadd.f32 %v148, %v447
    %v450 = vxor.u32 %v449, 2147483648
    %v451 = vmul.f32 %v450, 1.442695
    %v452 = vpow.pop %v451
    %v453 = vadd.f32 %v452, 1.0
    %v454 = vrcp.pop %v453
    %v455 = vmul.f32 %v453, %v454
    %v456 = vsub.f32 1.0, %v455
    %v457 = vmul.f32 %v454, %v456
    %v458 = vadd.f32 %v454, %v457
    %vm459 = vweird.f32 %v453
    %vm460 = vweird.f32 %v454
    %vm461 = vmor %vm459, %vm460
    %v462 = vsel %vm461, %v454, %v458
    %v463 = vand.u32 2147483647, %v453
    %vm464 = vcmp.eq.f32.partialorder %v463, 8.507059e+37
    %v465 = vand.u32 %v453, 2147483648
    %v466 = vor.u32 1.1754944e-38, %v465
    %v467 = vsel %vm464, %v466, %v462
    %v468 = vmul.f32 1.0, %v467
    %v469 = vtanh.pop %v449
    %v470 = vmul.f32 %v468, %v414
    %472 = vrot.lane.b32.xlu0 %v469, 64
    %v473 = vpop.permute.xlu0 %472
    %v475 = vmul.f32 %v468, %v473
    %477 = vrot.lane.b32.xlu0 %v475, 32
    %v478 = vpop.permute.xlu0 %477
    %v480 = vadd.f32 %v470, %v478
    %v481 = vtanh.pop %v480
    %483 = vrot.lane.b32.xlu0 %v481, 64
    %v484 = vpop.permute.xlu0 %483
    %v486 = vmul.f32 %v468, %v484
    %v487 = vadd.f32 %v421, %v486
    %489 = vst [vmem:[#allocation1] ss:$4 sm:$0xff] %v486
    %v490 = vld.sshfl [vmem:[#allocation1] sm:$0xff pattern:$0x73625140]
    %491 = vrot.lane.b32.xlu0 %v490, 32
    %v492 = vpop.permute.xlu0 %491
    %v493 = vsel %vm161, %v492, 0
    %495 = vmatpush.msra.mxu0 0.0
    %496 = vmatpush.msra.mxu0 0.0
    %497 = vmatpush.msra.mxu0 0.0
    %498 = vmatpush.msra.mxu0 0.0
    %499 = vmatpush.msra.mxu0 0.0
    %500 = vmatpush.msra.mxu0 0.0
    %501 = vmatpush.msra.mxu0 0.0
    %502 = vmatpush.msra.mxu0 0.0
    %503 = vmatpush.msra.mxu0 0.0
    %504 = vmatpush.msra.mxu0 0.0
    %505 = vmatpush.msra.mxu0 0.0
    %506 = vmatpush.msra.mxu0 0.0
    %507 = vmatpush.msra.mxu0 %v65
    %508 = vmatpush.msra.mxu0 %v64
    %509 = vmatpush.msra.mxu0 %v63
    %510 = vmatpush.msra.mxu0 %v62
    %511 = vmatmul.f32.gmra.mxu0 %v493
    %v512 = vpop.f32.mrf.mxu0
    %v513 = vadd.f32 0.0, %v512
    %514 = vdwg.mxu0
    %v515 = vadd.f32 %v158, %v513
    %v516 = vxor.u32 %v515, 2147483648
    %v517 = vmul.f32 %v516, 1.442695
    %v518 = vpow.pop %v517
    %v519 = vadd.f32 %v518, 1.0
    %v520 = vrcp.pop %v519
    %v521 = vmul.f32 %v519, %v520
    %v522 = vsub.f32 1.0, %v521
    %v523 = vmul.f32 %v520, %v522
    %v524 = vadd.f32 %v520, %v523
    %vm525 = vweird.f32 %v519
    %vm526 = vweird.f32 %v520
    %vm527 = vmor %vm525, %vm526
    %v528 = vsel %vm527, %v520, %v524
    %v529 = vand.u32 2147483647, %v519
    %vm530 = vcmp.eq.f32.partialorder %v529, 8.507059e+37
    %v531 = vand.u32 %v519, 2147483648
    %v532 = vor.u32 1.1754944e-38, %v531
    %v533 = vsel %vm530, %v532, %v528
    %v534 = vmul.f32 1.0, %v533
    %v535 = vtanh.pop %v515
    %v536 = vmul.f32 %v534, %v480
    %538 = vrot.lane.b32.xlu0 %v535, 64
    %v539 = vpop.permute.xlu0 %538
    %v541 = vmul.f32 %v534, %v539
    %543 = vrot.lane.b32.xlu0 %v541, 32
    %v544 = vpop.permute.xlu0 %543
    %v546 = vadd.f32 %v536, %v544
    %v547 = vtanh.pop %v546
    %549 = vrot.lane.b32.xlu0 %v547, 64
    %v550 = vpop.permute.xlu0 %549
    %v552 = vmul.f32 %v534, %v550
    %v553 = vadd.f32 %v487, %v552
    %555 = vst [vmem:[#allocation1] ss:$4 sm:$0xff] %v552
    %v556 = vld.sshfl [vmem:[#allocation1] sm:$0xff pattern:$0x73625140]
    %557 = vrot.lane.b32.xlu0 %v556, 32
    %v558 = vpop.permute.xlu0 %557
    %v559 = vsel %vm161, %v558, 0
    %561 = vmatpush.msra.mxu0 0.0
    %562 = vmatpush.msra.mxu0 0.0
    %563 = vmatpush.msra.mxu0 0.0
    %564 = vmatpush.msra.mxu0 0.0
    %565 = vmatpush.msra.mxu0 0.0
    %566 = vmatpush.msra.mxu0 0.0
    %567 = vmatpush.msra.mxu0 0.0
    %568 = vmatpush.msra.mxu0 0.0
    %569 = vmatpush.msra.mxu0 0.0
    %570 = vmatpush.msra.mxu0 0.0
    %571 = vmatpush.msra.mxu0 0.0
    %572 = vmatpush.msra.mxu0 0.0
    %573 = vmatpush.msra.mxu0 %v65
    %574 = vmatpush.msra.mxu0 %v64
    %575 = vmatpush.msra.mxu0 %v63
    %576 = vmatpush.msra.mxu0 %v62
    %577 = vmatmul.f32.gmra.mxu0 %v559
    %v578 = vpop.f32.mrf.mxu0
    %v579 = vadd.f32 0.0, %v578
    %580 = vdwg.mxu0
    %v581 = vadd.f32 %v152, %v579
    %v582 = vxor.u32 %v581, 2147483648
    %v583 = vmul.f32 %v582, 1.442695
    %v584 = vpow.pop %v583
    %v585 = vadd.f32 %v584, 1.0
    %v586 = vrcp.pop %v585
    %v587 = vmul.f32 %v585, %v586
    %v588 = vsub.f32 1.0, %v587
    %v589 = vmul.f32 %v586, %v588
    %v590 = vadd.f32 %v586, %v589
    %vm591 = vweird.f32 %v585
    %vm592 = vweird.f32 %v586
    %vm593 = vmor %vm591, %vm592
    %v594 = vsel %vm593, %v586, %v590
    %v595 = vand.u32 2147483647, %v585
    %vm596 = vcmp.eq.f32.partialorder %v595, 8.507059e+37
    %v597 = vand.u32 %v585, 2147483648
    %v598 = vor.u32 1.1754944e-38, %v597
    %v599 = vsel %vm596, %v598, %v594
    %v600 = vmul.f32 1.0, %v599
    %v601 = vtanh.pop %v581
    %v602 = vmul.f32 %v600, %v546
    %604 = vrot.lane.b32.xlu0 %v601, 64
    %v605 = vpop.permute.xlu0 %604
    %v607 = vmul.f32 %v600, %v605
    %609 = vrot.lane.b32.xlu0 %v607, 32
    %v610 = vpop.permute.xlu0 %609
    %v612 = vadd.f32 %v602, %v610
    %v613 = vtanh.pop %v612
    %615 = vrot.lane.b32.xlu0 %v613, 64
    %v616 = vpop.permute.xlu0 %615
    %v618 = vmul.f32 %v600, %v616
    %v619 = vadd.f32 %v553, %v618
    %621 = vst [vmem:[#allocation1] ss:$4 sm:$0xff] %v618
    %v622 = vld.sshfl [vmem:[#allocation1] sm:$0xff pattern:$0x73625140]
    %623 = vrot.lane.b32.xlu0 %v622, 32
    %v624 = vpop.permute.xlu0 %623
    %v625 = vsel %vm161, %v624, 0
    %627 = vmatpush.msra.mxu0 0.0
    %628 = vmatpush.msra.mxu0 0.0
    %629 = vmatpush.msra.mxu0 0.0
    %630 = vmatpush.msra.mxu0 0.0
    %631 = vmatpush.msra.mxu0 0.0
    %632 = vmatpush.msra.mxu0 0.0
    %633 = vmatpush.msra.mxu0 0.0
    %634 = vmatpush.msra.mxu0 0.0
    %635 = vmatpush.msra.mxu0 0.0
    %636 = vmatpush.msra.mxu0 0.0
    %637 = vmatpush.msra.mxu0 0.0
    %638 = vmatpush.msra.mxu0 0.0
    %639 = vmatpush.msra.mxu0 %v65
    %640 = vmatpush.msra.mxu0 %v64
    %641 = vmatpush.msra.mxu0 %v63
    %642 = vmatpush.msra.mxu0 %v62
    %643 = vmatmul.f32.gmra.mxu0 %v625
    %v644 = vpop.f32.mrf.mxu0
    %v645 = vadd.f32 0.0, %v644
    %646 = vdwg.mxu0
    %v647 = vadd.f32 %v160, %v645
    %v648 = vxor.u32 %v647, 2147483648
    %v649 = vmul.f32 %v648, 1.442695
    %v650 = vpow.pop %v649
    %v651 = vadd.f32 %v650, 1.0
    %v652 = vrcp.pop %v651
    %v653 = vmul.f32 %v651, %v652
    %v654 = vsub.f32 1.0, %v653
    %v655 = vmul.f32 %v652, %v654
    %v656 = vadd.f32 %v652, %v655
    %vm657 = vweird.f32 %v651
    %vm658 = vweird.f32 %v652
    %vm659 = vmor %vm657, %vm658
    %v660 = vsel %vm659, %v652, %v656
    %v661 = vand.u32 2147483647, %v651
    %vm662 = vcmp.eq.f32.partialorder %v661, 8.507059e+37
    %v663 = vand.u32 %v651, 2147483648
    %v664 = vor.u32 1.1754944e-38, %v663
    %v665 = vsel %vm662, %v664, %v660
    %v666 = vmul.f32 1.0, %v665
    %v667 = vtanh.pop %v647
    %v668 = vmul.f32 %v666, %v612
    %670 = vrot.lane.b32.xlu0 %v667, 64
    %v671 = vpop.permute.xlu0 %670
    %v673 = vmul.f32 %v666, %v671
    %675 = vrot.lane.b32.xlu0 %v673, 32
    %v676 = vpop.permute.xlu0 %675
    %v678 = vadd.f32 %v668, %v676
    %v679 = vtanh.pop %v678
    %681 = vrot.lane.b32.xlu0 %v679, 64
    %v682 = vpop.permute.xlu0 %681
    %v684 = vmul.f32 %v666, %v682
    %v685 = vadd.f32 %v619, %v684
    %v686 = vmul.f32 %v685, 0.125
    %v687 = vld [vmem:[#allocation5] sm:$0x3]
    %v688 = vperm.slane %v68, 0
    %vm689 = vcmask 31744
    %v691 = vsel %vm689, %v687, 0
    %vm693 = vcmask 1043456
    %v695 = vsel %vm693, %v67, 0
    %697 = vmatpush.msra.mxu0 0.0
    %698 = vmatpush.msra.mxu0 0.0
    %699 = vmatpush.msra.mxu0 0.0
    %700 = vmatpush.msra.mxu0 0.0
    %701 = vmatpush.msra.mxu0 0.0
    %702 = vmatpush.msra.mxu0 0.0
    %703 = vmatpush.msra.mxu0 0.0
    %704 = vmatpush.msra.mxu0 0.0
    %705 = vmatpush.msra.mxu0 0.0
    %706 = vmatpush.msra.mxu0 0.0
    %707 = vmatpush.msra.mxu0 0.0
    %708 = vmatpush.msra.mxu0 0.0
    %709 = vmatpush.msra.mxu0 0.0
    %710 = vmatpush.msra.mxu0 0.0
    %711 = vmatpush.msra.mxu0 0.0
    %712 = vmatpush.msra.mxu0 %v695
    %713 = vmatmul.f32.gmra.mxu0 %v691
    %v714 = vpop.f32.mrf.mxu0
    %v715 = vadd.f32 %v688, %v714
    %716 = vdwg.mxu0
    %vm717 = vcmask 64512
    %v719 = vsel %vm717, %v715, 0
    %721 = vmatpush.msra.mxu0 0.0
    %722 = vmatpush.msra.mxu0 0.0
    %723 = vmatpush.msra.mxu0 0.0
    %724 = vmatpush.msra.mxu0 0.0
    %725 = vmatpush.msra.mxu0 0.0
    %726 = vmatpush.msra.mxu0 0.0
    %727 = vmatpush.msra.mxu0 0.0
    %728 = vmatpush.msra.mxu0 0.0
    %729 = vmatpush.msra.mxu0 0.0
    %730 = vmatpush.msra.mxu0 0.0
    %731 = vmatpush.msra.mxu0 0.0
    %732 = vmatpush.msra.mxu0 0.0
    %733 = vmatpush.msra.mxu0 0.0
    %734 = vmatpush.msra.mxu0 0.0
    %735 = vmatpush.msra.mxu0 0.0
    %736 = vmatpush.msra.mxu0 %v73
    %737 = vmatmul.f32.gmra.mxu0 %v719
    %v738 = vpop.f32.mrf.mxu0
    %v739 = vadd.f32 0.0, %v738
    %740 = vdwg.mxu0
    %742 = vst [vmem:[#allocation1] ss:$4 sm:$0xff] %v686
    %v743 = vld.sshfl [vmem:[#allocation1] sm:$0xff pattern:$0x73625140]
    %744 = vrot.lane.b32.xlu0 %v743, 32
    %v745 = vpop.permute.xlu0 %744
    %v746 = vsel %vm161, %v745, 0
    %748 = vmatpush.msra.mxu0 0.0
    %749 = vmatpush.msra.mxu0 0.0
    %750 = vmatpush.msra.mxu0 0.0
    %751 = vmatpush.msra.mxu0 0.0
    %752 = vmatpush.msra.mxu0 0.0
    %753 = vmatpush.msra.mxu0 0.0
    %754 = vmatpush.msra.mxu0 0.0
    %755 = vmatpush.msra.mxu0 0.0
    %756 = vmatpush.msra.mxu0 0.0
    %757 = vmatpush.msra.mxu0 0.0
    %758 = vmatpush.msra.mxu0 0.0
    %759 = vmatpush.msra.mxu0 0.0
    %760 = vmatpush.msra.mxu0 %v72
    %761 = vmatpush.msra.mxu0 %v71
    %762 = vmatpush.msra.mxu0 %v70
    %763 = vmatpush.msra.mxu0 %v69
    %764 = vmatmul.f32.gmra.mxu0 %v746
    %v765 = vpop.f32.mrf.mxu0
    %v766 = vadd.f32 %v739, %v765
    %767 = vdwg.mxu0
    %v768 = vperm.slane %v74, 0
    %v769 = vadd.f32 %v766, %v768
    %v770 = vxor.u32 %v769, 2147483648
    %v771 = vmul.f32 %v770, 1.442695
    %v772 = vpow.pop %v771
    %v773 = vadd.f32 %v772, 1.0
    %v774 = vrcp.pop %v773
    %v775 = vmul.f32 %v773, %v774
    %v776 = vsub.f32 1.0, %v775
    %v777 = vmul.f32 %v774, %v776
    %v778 = vadd.f32 %v774, %v777
    %vm779 = vweird.f32 %v773
    %vm780 = vweird.f32 %v774
    %vm781 = vmor %vm779, %vm780
    %v782 = vsel %vm781, %v774, %v778
    %v783 = vand.u32 2147483647, %v773
    %vm784 = vcmp.eq.f32.partialorder %v783, 8.507059e+37
    %v785 = vand.u32 %v773, 2147483648
    %v786 = vor.u32 1.1754944e-38, %v785
    %v787 = vsel %vm784, %v786, %v782
    %v788 = vmul.f32 1.0, %v787
    %vm789 = vcmask 25600
    %790 = vst.msk [vmem:[#allocation8] sm:$0x3] %vm789, %v788
    // Predicated region
    $region26: #{net_forward.1} parent=1 // pred_check
      _
    $region27: #{net_forward.1} parent=1 // pred_check_branch
      %792 = sbr.rel (0) target = $region29
    $region28: #{net_forward.1} parent=1 // pred_region
      %794 = vsyncadd [#allocation4], 0
      %s796 = sshll.u32 [#allocation8], 4
      %s797 = int_to_ptr.vmem [resolvable:$true] %s796
      %s798 = sshll.u32 %s3, 4
      %s799 = int_to_ptr.hbm [resolvable:$true] %s798
      %801 = dma.vmem_to_hbm [thread:$0]  %s797, 32, %s799, [#allocation4]
    $region29: #{net_forward.1} parent=1 // pred_fallthru
      _
    // Predicated region
    $region30: #{net_forward.1} parent=1 // pred_check
      _
    $region31: #{net_forward.1} parent=1 // pred_check_branch
      %803 = sbr.rel (0) target = $region33
    $region32: #{net_forward.1} parent=1 // pred_region
      %805 = dma.done [#allocation4], 32
    $region33: #{net_forward.1} parent=1 // pred_fallthru
      _
    %806 = vsyncpa [#allocation3], 1
    %807 = vsyncpa [#allocation6], 1
    %808 = vsyncpa [#allocation4], 1

</llo_original>
